<compile_context>
chip_gen: v7x
topology: tpu7x:2x2x1
jax: 0.10.0
libtpu: 0.0.40
codegen_flags: <defaults>
</compile_context>

<pallas_src>
import jax
import jax.numpy as jnp
from jax.experimental import pallas as pl
from jax.experimental.pallas import tpu as pltpu

H1, H2 = 400, 300                 # logical hidden sizes (PyTorch module)
H1P, H2P = 512, 384               # lane-dense padded hidden sizes
NOUT_MM = 128                     # padded w3/b3 width used for the MXU matmul
NOUT_HBM = 8                      # lanes actually written back to HBM (col 0 = q)

_STEP_OVERHEAD_ROWS = 350         # ~0.35us grid-step overhead in row-equivalents


def _round_up(x, m):
    return ((x + m - 1) // m) * m


def _pick_tile(B):
    """Choose the batch tile.

    Minimise (padded rows processed + per-step overhead); once B > 256 require
    >= 2 grid steps so the "parallel" grid axis can shard across v7x's two
    TensorCores; cap the tile at 1024 rows to bound VMEM intermediates.
    """
    b16 = _round_up(B, 16)
    if b16 <= 128:
        return b16                                   # one small tile
    half = _round_up((B + 1) // 2, 16)
    cands = {128, 256, 512, 1024}
    if b16 <= 1024:
        cands.add(b16)
    if half <= 1024:
        cands.add(half)
    best_key, best_tm = None, None
    for tm in sorted(cands):
        b_pad = _round_up(B, tm)
        steps = b_pad // tm
        penalty = 1 if (steps < 2 and B > 256) else 0    # keep v7x's 2nd TC busy
        cost = b_pad + steps * _STEP_OVERHEAD_ROWS       # padded work + step overhead
        key = (penalty, cost, steps)
        if best_key is None or key < best_key:
            best_key, best_tm = key, tm
    return best_tm


def critic_kernel(x_ref, w1_ref, b1_ref, w2_ref, b2_ref, w3_ref, b3_ref, q_ref):
    """One batch tile: (TM, DIN_P) bf16 -> (TM, NOUT_HBM) f32 fused 3-layer MLP."""
    x = x_ref[...]                                            # (TM, DIN_P) bf16

    # Layer 1: single combined matmul (concat fused in the wrapper), f32 acc,
    # bias + ReLU in f32, cast fused into the epilogue.
    h1 = jnp.dot(x, w1_ref[...], preferred_element_type=jnp.float32)
    h1 = jnp.maximum(h1 + b1_ref[...], 0.0).astype(jnp.bfloat16)   # (TM, 512)

    # Layer 2.
    h2 = jnp.dot(h1, w2_ref[...], preferred_element_type=jnp.float32)
    h2 = jnp.maximum(h2 + b2_ref[...], 0.0).astype(jnp.bfloat16)   # (TM, 384)

    # Layer 3: lane-dense 128-wide matmul, but only the first NOUT_HBM lanes
    # (real q in column 0) are stored to HBM.
    q = jnp.dot(h2, w3_ref[...], preferred_element_type=jnp.float32) + b3_ref[...]
    q_ref[...] = q[:, :NOUT_HBM].astype(q_ref.dtype)


def _resident(arr):
    # Constant block index across the grid -> stays in VMEM for all steps.
    return pl.BlockSpec(arr.shape, lambda i: (0, 0))


def critic_forward(state, action, repetition, kparams, *, tm=None):
    """Run the fused critic MLP.  kparams come from prepare_kernel_params."""
    w1, b1, w2, b2, w3, b3 = kparams

    B = state.shape[0]
    din = state.shape[1] + action.shape[1] + repetition.shape[1]
    din_p = w1.shape[0]

    # Fused concat + bf16 cast in the wrapper (one input DMA stream, half the
    # bytes of three f32 streams).  Padded K columns are zero, matching the
    # zero-padded rows of w1.
    x = jnp.concatenate([state, action, repetition], axis=1).astype(jnp.bfloat16)
    if din_p != din:
        x = jnp.pad(x, ((0, 0), (0, din_p - din)))

    if tm is None:
        tm = _pick_tile(B)
    b_pad = _round_up(B, tm)
    if b_pad != B:
        x = jnp.pad(x, ((0, b_pad - B), (0, 0)))

    grid = (b_pad // tm,)

    flops = 2 * b_pad * (din_p * H1P + H1P * H2P + H2P * NOUT_MM)
    bytes_accessed = (
        b_pad * din_p * 2                                   # bf16 input
        + (w1.size + w2.size + w3.size) * 2                 # bf16 weights
        + (b1.size + b2.size + b3.size) * 4                 # f32 biases
        + b_pad * NOUT_HBM * 4                              # f32 output
    )

    q_pad = pl.pallas_call(
        critic_kernel,
        out_shape=jax.ShapeDtypeStruct((b_pad, NOUT_HBM), jnp.float32),
        grid=grid,
        in_specs=[
            pl.BlockSpec((tm, din_p), lambda i: (i, 0)),
            _resident(w1), _resident(b1),
            _resident(w2), _resident(b2),
            _resident(w3), _resident(b3),
        ],
        out_specs=pl.BlockSpec((tm, NOUT_HBM), lambda i: (i, 0)),
        compiler_params=pltpu.CompilerParams(
            dimension_semantics=("parallel",)),
        cost_estimate=pl.CostEstimate(
            flops=int(flops), transcendentals=0,
            bytes_accessed=int(bytes_accessed)),
    )(x, w1, b1, w2, b2, w3, b3)

    # Padded rows / padded lanes carry garbage; slice them off here.  Do NOT
    # reduce over q_pad before this slice.
    return q_pad[:B, :1]


def init_critic_params(key, state_dim, action_dim, repetition_dim):
    """PyTorch-Linear-style init, weights stored (in_features, out_features)."""
    dims = [(state_dim + action_dim + repetition_dim, H1), (H1, H2), (H2, 1)]
    params = []
    for i, (fan_in, fan_out) in enumerate(dims):
        kw, kb = jax.random.split(jax.random.fold_in(key, i))
        bound = 1.0 / jnp.sqrt(fan_in)
        w = jax.random.uniform(kw, (fan_in, fan_out), jnp.float32, -bound, bound)
        b = jax.random.uniform(kb, (1, fan_out), jnp.float32, -bound, bound)
        params += [w, b]
    return tuple(params)


def prepare_kernel_params(params):
    """Zero-pad to lane-dense shapes; single combined w1; weights cast to bf16.

    Invariant: all padded rows/columns are zero (so padded K lanes of the input
    and padded hidden units contribute nothing).
    """
    w1, b1, w2, b2, w3, b3 = params
    din = w1.shape[0]
    din_p = _round_up(din, 16)        # bf16 sublane packing for w1's K rows

    def pad2(x, rows, cols):
        return jnp.pad(x, ((0, rows - x.shape[0]), (0, cols - x.shape[1])))

    w1p = pad2(w1, din_p, H1P).astype(jnp.bfloat16)    # (DIN_P, 512)
    b1p = pad2(b1, 1, H1P)                             # f32
    w2p = pad2(w2, H1P, H2P).astype(jnp.bfloat16)      # (512, 384)
    b2p = pad2(b2, 1, H2P)
    w3p = pad2(w3, H2P, NOUT_MM).astype(jnp.bfloat16)  # (384, 128)
    b3p = pad2(b3, 1, NOUT_MM)
    return (w1p, b1p, w2p, b2p, w3p, b3p)


if __name__ == "__main__":
    key = jax.random.PRNGKey(0)
    k_s, k_a, k_r, k_p = jax.random.split(key, 4)

    B = 2
    state_dim, action_dim, repetition_dim = 16, 4, 4

    state = jax.random.normal(k_s, (B, state_dim), jnp.float32)
    action = jax.random.normal(k_a, (B, action_dim), jnp.float32)
    repetition = jax.random.normal(k_r, (B, repetition_dim), jnp.float32)

    params = init_critic_params(k_p, state_dim, action_dim, repetition_dim)
    kparams = prepare_kernel_params(params)

    q = critic_forward(state, action, repetition, kparams)
    jax.block_until_ready(q)

    # Tight reference: same bf16 weights / f32 accumulation as the kernel.
    w1p, b1p, w2p, b2p, w3p, b3p = kparams
    din = state_dim + action_dim + repetition_dim
    xb = jnp.concatenate([state, action, repetition], axis=1).astype(jnp.bfloat16)
    xb = jnp.pad(xb, ((0, 0), (0, w1p.shape[0] - din)))
    h1 = jnp.maximum(
        jnp.dot(xb, w1p, preferred_element_type=jnp.float32) + b1p, 0.0)
    h2 = jnp.maximum(
        jnp.dot(h1.astype(jnp.bfloat16), w2p,
                preferred_element_type=jnp.float32) + b2p, 0.0)
    ref_bf16 = (jnp.dot(h2.astype(jnp.bfloat16), w3p,
                        preferred_element_type=jnp.float32) + b3p)[:, :1]

    # Loose reference: the original f32 module (documents bf16-weight tolerance).
    w1f, b1f, w2f, b2f, w3f, b3f = params
    xf = jnp.concatenate([state, action, repetition], axis=1)
    h1f = jnp.maximum(xf @ w1f + b1f, 0.0)
    h2f = jnp.maximum(h1f @ w2f + b2f, 0.0)
    ref_f32 = h2f @ w3f + b3f

    assert q.shape == (B, 1)
    assert jnp.allclose(q, ref_bf16, atol=1e-3, rtol=1e-3)
    assert jnp.allclose(q, ref_f32, atol=2e-2, rtol=2e-2)

    print("KERNEL_OK")
</pallas_src>

<mosaic_0001>
module attributes {stable_mosaic.version = 11 : i64} {
  func.func @critic_kernel(%arg0: i32, %arg1: memref<16x32xbf16, #tpu.memory_space<vmem>>, %arg2: memref<32x512xbf16, #tpu.memory_space<vmem>>, %arg3: memref<1x512xf32, #tpu.memory_space<vmem>>, %arg4: memref<512x384xbf16, #tpu.memory_space<vmem>>, %arg5: memref<1x384xf32, #tpu.memory_space<vmem>>, %arg6: memref<384x128xbf16, #tpu.memory_space<vmem>>, %arg7: memref<1x128xf32, #tpu.memory_space<vmem>>, %arg8: memref<16x8xf32, #tpu.memory_space<vmem>>) attributes {dimension_semantics = [#tpu.dimension_semantics<parallel>], iteration_bounds = array<i64: 1>, scalar_prefetch = 0 : i64, scratch_operands = 0 : i64, tpu.core_type = #tpu.core_type<tc>, window_params = [{transform_indices = @transform_0, window_bounds = array<i64: 16, 32>}, {pipeline_mode = #tpu.pipeline_mode<synchronous>, transform_indices = @transform_1, window_bounds = array<i64: 32, 512>}, {pipeline_mode = #tpu.pipeline_mode<synchronous>, transform_indices = @transform_2, window_bounds = array<i64: 1, 512>}, {pipeline_mode = #tpu.pipeline_mode<synchronous>, transform_indices = @transform_3, window_bounds = array<i64: 512, 384>}, {pipeline_mode = #tpu.pipeline_mode<synchronous>, transform_indices = @transform_4, window_bounds = array<i64: 1, 384>}, {pipeline_mode = #tpu.pipeline_mode<synchronous>, transform_indices = @transform_5, window_bounds = array<i64: 384, 128>}, {pipeline_mode = #tpu.pipeline_mode<synchronous>, transform_indices = @transform_6, window_bounds = array<i64: 1, 128>}, {transform_indices = @transform_7, window_bounds = array<i64: 16, 8>}]} {
    %c0 = arith.constant 0 : index
    %c0_0 = arith.constant 0 : index
    %0 = vector.load %arg1[%c0, %c0_0] : memref<16x32xbf16, #tpu.memory_space<vmem>>, vector<16x32xbf16>
    %c0_1 = arith.constant 0 : index
    %c0_2 = arith.constant 0 : index
    %1 = vector.load %arg2[%c0_1, %c0_2] : memref<32x512xbf16, #tpu.memory_space<vmem>>, vector<32x512xbf16>
    %cst = arith.constant dense<0.000000e+00> : vector<16x512xf32>
    %2 = tpu.matmul %0, %1, %cst {dimension_numbers = #tpu.dot_dimension_numbers<[1], [0], [0], [1], [0, 0, 1, 1], [], []>} : vector<16x32xbf16>, vector<32x512xbf16>, vector<16x512xf32> -> vector<16x512xf32>
    %c0_3 = arith.constant 0 : index
    %c0_4 = arith.constant 0 : index
    %3 = vector.load %arg3[%c0_3, %c0_4] : memref<1x512xf32, #tpu.memory_space<vmem>>, vector<1x512xf32>
    %4 = vector.broadcast %3 : vector<1x512xf32> to vector<16x512xf32>
    %5 = arith.addf %2, %4 : vector<16x512xf32>
    %cst_5 = arith.constant 0.000000e+00 : f32
    %6 = vector.broadcast %cst_5 : f32 to vector<16x512xf32>
    %7 = arith.maximumf %5, %6 : vector<16x512xf32>
    %8 = arith.truncf %7 : vector<16x512xf32> to vector<16x512xbf16>
    %c0_6 = arith.constant 0 : index
    %c0_7 = arith.constant 0 : index
    %9 = vector.load %arg4[%c0_6, %c0_7] : memref<512x384xbf16, #tpu.memory_space<vmem>>, vector<512x384xbf16>
    %cst_8 = arith.constant dense<0.000000e+00> : vector<16x384xf32>
    %10 = tpu.matmul %8, %9, %cst_8 {dimension_numbers = #tpu.dot_dimension_numbers<[1], [0], [0], [1], [0, 0, 1, 1], [], []>} : vector<16x512xbf16>, vector<512x384xbf16>, vector<16x384xf32> -> vector<16x384xf32>
    %c0_9 = arith.constant 0 : index
    %c0_10 = arith.constant 0 : index
    %11 = vector.load %arg5[%c0_9, %c0_10] : memref<1x384xf32, #tpu.memory_space<vmem>>, vector<1x384xf32>
    %12 = vector.broadcast %11 : vector<1x384xf32> to vector<16x384xf32>
    %13 = arith.addf %10, %12 : vector<16x384xf32>
    %cst_11 = arith.constant 0.000000e+00 : f32
    %14 = vector.broadcast %cst_11 : f32 to vector<16x384xf32>
    %15 = arith.maximumf %13, %14 : vector<16x384xf32>
    %16 = arith.truncf %15 : vector<16x384xf32> to vector<16x384xbf16>
    %c0_12 = arith.constant 0 : index
    %c0_13 = arith.constant 0 : index
    %17 = vector.load %arg6[%c0_12, %c0_13] : memref<384x128xbf16, #tpu.memory_space<vmem>>, vector<384x128xbf16>
    %cst_14 = arith.constant dense<0.000000e+00> : vector<16x128xf32>
    %18 = tpu.matmul %16, %17, %cst_14 {dimension_numbers = #tpu.dot_dimension_numbers<[1], [0], [0], [1], [0, 0, 1, 1], [], []>} : vector<16x384xbf16>, vector<384x128xbf16>, vector<16x128xf32> -> vector<16x128xf32>
    %c0_15 = arith.constant 0 : index
    %c0_16 = arith.constant 0 : index
    %19 = vector.load %arg7[%c0_15, %c0_16] : memref<1x128xf32, #tpu.memory_space<vmem>>, vector<1x128xf32>
    %20 = vector.broadcast %19 : vector<1x128xf32> to vector<16x128xf32>
    %21 = arith.addf %18, %20 : vector<16x128xf32>
    %22 = vector.extract_strided_slice %21 {offsets = [0, 0], sizes = [16, 8], strides = [1, 1]} : vector<16x128xf32> to vector<16x8xf32>
    %c0_17 = arith.constant 0 : index
    %c0_18 = arith.constant 0 : index
    %23 = vector.load %arg8[%c0_17, %c0_18] : memref<16x8xf32, #tpu.memory_space<vmem>>, vector<16x8xf32>
    tpu.vector_store %arg8[%c0_17, %c0_18], %22 {strides = array<i32>} : memref<16x8xf32, #tpu.memory_space<vmem>>, vector<16x8xf32>,
    return
  }
  func.func @transform_0(%arg0: i32) -> (i32, i32) {
    %c0_i32 = arith.constant 0 : i32
    %c0_i32_0 = arith.constant 0 : i32
    return %arg0, %c0_i32 : i32, i32
  }
  func.func @transform_1(%arg0: i32) -> (i32, i32) {
    %c0_i32 = arith.constant 0 : i32
    %c0_i32_0 = arith.constant 0 : i32
    %c0_i32_1 = arith.constant 0 : i32
    return %c0_i32, %c0_i32_0 : i32, i32
  }
  func.func @transform_2(%arg0: i32) -> (i32, i32) {
    %c0_i32 = arith.constant 0 : i32
    %c0_i32_0 = arith.constant 0 : i32
    %c0_i32_1 = arith.constant 0 : i32
    return %c0_i32, %c0_i32_0 : i32, i32
  }
  func.func @transform_3(%arg0: i32) -> (i32, i32) {
    %c0_i32 = arith.constant 0 : i32
    %c0_i32_0 = arith.constant 0 : i32
    %c0_i32_1 = arith.constant 0 : i32
    return %c0_i32, %c0_i32_0 : i32, i32
  }
  func.func @transform_4(%arg0: i32) -> (i32, i32) {
    %c0_i32 = arith.constant 0 : i32
    %c0_i32_0 = arith.constant 0 : i32
    %c0_i32_1 = arith.constant 0 : i32
    return %c0_i32, %c0_i32_0 : i32, i32
  }
  func.func @transform_5(%arg0: i32) -> (i32, i32) {
    %c0_i32 = arith.constant 0 : i32
    %c0_i32_0 = arith.constant 0 : i32
    %c0_i32_1 = arith.constant 0 : i32
    return %c0_i32, %c0_i32_0 : i32, i32
  }
  func.func @transform_6(%arg0: i32) -> (i32, i32) {
    %c0_i32 = arith.constant 0 : i32
    %c0_i32_0 = arith.constant 0 : i32
    %c0_i32_1 = arith.constant 0 : i32
    return %c0_i32, %c0_i32_0 : i32, i32
  }
  func.func @transform_7(%arg0: i32) -> (i32, i32) {
    %c0_i32 = arith.constant 0 : i32
    %c0_i32_0 = arith.constant 0 : i32
    return %arg0, %c0_i32 : i32, i32
  }
}

</mosaic_0001>

<llo_original>
// kernel: tpu_custom_call.1
$region0: #{tpu_custom_call.1}
  #allocation0 [shape = 'u32[]', space=smem, size = 0x4, offset = 0x4, fixed_abs, tag = 'smem constant byte address 0x4 - core index']
  #allocation1 [shape = 'u32[144,128]{1,0:T(1,128)}', space=vmem, size = 0x12000, scoped, tag = 'internal scratch']
  %s0 = inlined_call_operand.hbm [shape: bf16[16,32], index: 0, kind: input, shape index: {}]
  %s1 = inlined_call_operand.hbm [shape: bf16[32,512], index: 1, kind: input, shape index: {}]
  %s2 = inlined_call_operand.vmem [shape: f32[1,512], index: 2, kind: input, shape index: {}]
  %s3 = inlined_call_operand.hbm [shape: bf16[512,384], index: 3, kind: input, shape index: {}]
  %s4 = inlined_call_operand.vmem [shape: f32[1,384], index: 4, kind: input, shape index: {}]
  %s5 = inlined_call_operand.hbm [shape: bf16[384,128], index: 5, kind: input, shape index: {}]
  %s6 = inlined_call_operand.vmem [shape: f32[1,128], index: 6, kind: input, shape index: {}]
  %s7 = inlined_call_operand.vmem [shape: f32[16,8], index: 7, kind: output, shape index: {}]
  %s8 = sld [smem:[#allocation0]]
  $region54: #{tpu_custom_call.1} parent=0
    _
  %s10 = ssub.s32 1, %s8
  %s11 = scalar_select 0, %s10, %s8
  $region1: #{tpu_custom_call.1} parent=0
    #allocation2 [shape = 'u8[4096]{0}', space=vmem, size = 0x1000, scoped, tag = 'input window, operand 0, single buffered']
    #allocation3 [shape = 's32[1]{0}', space=sflag, size = 0x4, scoped, tag = 'scoped memory for tpu_custom_call.1']
    #allocation4 [shape = 'u8[32768]{0}', space=vmem, size = 0x8000, scoped, tag = 'input window, operand 1, single buffered']
    #allocation5 [shape = 's32[1]{0}', space=sflag, size = 0x4, scoped, tag = 'scoped memory for tpu_custom_call.1']
    #allocation6 [shape = 'u8[393216]{0}', space=vmem, size = 0x60000, scoped, tag = 'input window, operand 3, single buffered']
    #allocation7 [shape = 'u8[98304]{0}', space=vmem, size = 0x18000, scoped, tag = 'input window, operand 5, single buffered']
    #allocation8 [shape = 's32[1]{0}', space=sflag, size = 0x4, scoped, tag = 'scoped memory for tpu_custom_call.1']
    %12 = vsyncpa [#allocation3], 0
    %13 = vsyncpa [#allocation5], 0
    %14 = vsyncpa [#allocation8], 0
    // Predicated region
    $region2: #{tpu_custom_call.1} parent=1 // pred_check
      _
    $region3: #{tpu_custom_call.1} parent=1 // pred_check_branch
      %16 = sbr.rel (0) target = $region5
    $region4: #{tpu_custom_call.1} parent=1 // pred_region
      %s18 = ssub.s32 128, 128
      %19 = vsyncadd [#allocation3], %s18
      %s20 = sshll.u32 [#allocation2], 4
      %s21 = int_to_ptr.vmem [resolvable:$true] %s20
      %26 = dma.hbm_to_vmem [thread:$0]  %s0, 128, %s21, [#allocation3], 64, 64, 4
    $region5: #{tpu_custom_call.1} parent=1 // pred_fallthru
      _
    // Predicated region
    $region6: #{tpu_custom_call.1} parent=1 // pred_check
      _
    $region7: #{tpu_custom_call.1} parent=1 // pred_check_branch
      %28 = sbr.rel (0) target = $region9
    $region8: #{tpu_custom_call.1} parent=1 // pred_region
      %s30 = ssub.s32 1024, 1024
      %31 = vsyncadd [#allocation5], %s30
      %s32 = sshll.u32 [#allocation4], 4
      %s33 = int_to_ptr.vmem [resolvable:$true] %s32
      %38 = dma.hbm_to_vmem [thread:$0]  %s1, 1024, %s33, [#allocation5], 256, 256, 16
    $region9: #{tpu_custom_call.1} parent=1 // pred_fallthru
      _
    // Predicated region
    $region10: #{tpu_custom_call.1} parent=1 // pred_check
      _
    $region11: #{tpu_custom_call.1} parent=1 // pred_check_branch
      %40 = sbr.rel (0) target = $region13
    $region12: #{tpu_custom_call.1} parent=1 // pred_region
      _
    $region13: #{tpu_custom_call.1} parent=1 // pred_fallthru
      _
    // Predicated region
    $region14: #{tpu_custom_call.1} parent=1 // pred_check
      _
    $region15: #{tpu_custom_call.1} parent=1 // pred_check_branch
      %42 = sbr.rel (0) target = $region17
    $region16: #{tpu_custom_call.1} parent=1 // pred_region
      %s44 = ssub.s32 12288, 12288
      %45 = vsyncadd [#allocation5], %s44
      %s46 = sshll.u32 [#allocation6], 4
      %s47 = int_to_ptr.vmem [resolvable:$true] %s46
      %52 = dma.hbm_to_vmem [thread:$0]  %s3, 12288, %s47, [#allocation5], 192, 192, 12
    $region17: #{tpu_custom_call.1} parent=1 // pred_fallthru
      _
    // Predicated region
    $region18: #{tpu_custom_call.1} parent=1 // pred_check
      _
    $region19: #{tpu_custom_call.1} parent=1 // pred_check_branch
      %54 = sbr.rel (0) target = $region21
    $region20: #{tpu_custom_call.1} parent=1 // pred_region
      _
    $region21: #{tpu_custom_call.1} parent=1 // pred_fallthru
      _
    // Predicated region
    $region22: #{tpu_custom_call.1} parent=1 // pred_check
      _
    $region23: #{tpu_custom_call.1} parent=1 // pred_check_branch
      %56 = sbr.rel (0) target = $region25
    $region24: #{tpu_custom_call.1} parent=1 // pred_region
      %s58 = ssub.s32 3072, 3072
      %59 = vsyncadd [#allocation8], %s58
      %s60 = sshll.u32 [#allocation7], 4
      %s61 = int_to_ptr.vmem [resolvable:$true] %s60
      %66 = dma.hbm_to_vmem [thread:$0]  %s5, 3072, %s61, [#allocation8], 64, 64, 4
    $region25: #{tpu_custom_call.1} parent=1 // pred_fallthru
      _
    // Predicated region
    $region26: #{tpu_custom_call.1} parent=1 // pred_check
      _
    $region27: #{tpu_custom_call.1} parent=1 // pred_check_branch
      %68 = sbr.rel (0) target = $region29
    $region28: #{tpu_custom_call.1} parent=1 // pred_region
      _
    $region29: #{tpu_custom_call.1} parent=1 // pred_fallthru
      _
    // Predicated region
    $region30: #{tpu_custom_call.1} parent=1 // pred_check
      _
    $region31: #{tpu_custom_call.1} parent=1 // pred_check_branch
      %70 = sbr.rel (0) target = $region33
    $region32: #{tpu_custom_call.1} parent=1 // pred_region
      %71 = dma.done [#allocation3], 128
    $region33: #{tpu_custom_call.1} parent=1 // pred_fallthru
      _
    // Predicated region
    $region34: #{tpu_custom_call.1} parent=1 // pred_check
      _
    $region35: #{tpu_custom_call.1} parent=1 // pred_check_branch
      %73 = sbr.rel (0) target = $region37
    $region36: #{tpu_custom_call.1} parent=1 // pred_region
      %74 = dma.done [#allocation5], 1024
    $region37: #{tpu_custom_call.1} parent=1 // pred_fallthru
      _
    // Predicated region
    $region38: #{tpu_custom_call.1} parent=1 // pred_check
      _
    $region39: #{tpu_custom_call.1} parent=1 // pred_check_branch
      %76 = sbr.rel (0) target = $region41
    $region40: #{tpu_custom_call.1} parent=1 // pred_region
      %77 = dma.done [#allocation5], 12288
    $region41: #{tpu_custom_call.1} parent=1 // pred_fallthru
      _
    // Predicated region
    $region42: #{tpu_custom_call.1} parent=1 // pred_check
      _
    $region43: #{tpu_custom_call.1} parent=1 // pred_check_branch
      %79 = sbr.rel (0) target = $region45
    $region44: #{tpu_custom_call.1} parent=1 // pred_region
      %80 = dma.done [#allocation8], 3072
    $region45: #{tpu_custom_call.1} parent=1 // pred_fallthru
      _
    %v82 = vld [vmem:[#allocation2] sm:$0xf]
    %v83 = vld [vmem:[#allocation2 + $0x4] sm:$0xf]
    %v84 = vld [vmem:[#allocation4] sm:$0xff]
    %v85 = vld [vmem:[#allocation4 + $0x8] sm:$0xff]
    %v86 = vld [vmem:[#allocation4 + $0x10] sm:$0xff]
    %v87 = vld [vmem:[#allocation4 + $0x18] sm:$0xff]
    %v88 = vld [vmem:[#allocation4 + $0x20] sm:$0xff]
    %v89 = vld [vmem:[#allocation4 + $0x28] sm:$0xff]
    %v90 = vld [vmem:[#allocation4 + $0x30] sm:$0xff]
    %v91 = vld [vmem:[#allocation4 + $0x38] sm:$0xff]
    %v92 = vld [vmem:[%s2] sm:$0xf]
    %v94 = vlaneseq
    %v95 = vshrl.u32 %v94, 7
    %v96 = vsub.s32 0, %v95
    %v97 = vrot.slane %v92, %v96
    %v98 = vlaneseq
    %v99 = vshrl.u32 %v98, 7
    %v100 = vsub.s32 1, %v99
    %v101 = vrot.slane %v92, %v100
    %v102 = vlaneseq
    %v103 = vshrl.u32 %v102, 7
    %v104 = vsub.s32 2, %v103
    %v105 = vrot.slane %v92, %v104
    %v106 = vlaneseq
    %v107 = vshrl.u32 %v106, 7
    %v108 = vsub.s32 3, %v107
    %v109 = vrot.slane %v92, %v108
    %v116 = vunpack.c.l.b16 %v82
    %v117 = vunpack.c.l.b16 %v83
    %v118 = vpack.c.b16 %v117, %v116
    %v127 = vunpack.c.l.b16 %v84
    %v128 = vunpack.c.h.b16 %v84
    %v129 = vunpack.c.l.b16 %v85
    %v130 = vunpack.c.h.b16 %v85
    %v131 = vunpack.c.l.b16 %v86
    %v132 = vunpack.c.h.b16 %v86
    %v133 = vunpack.c.l.b16 %v87
    %v134 = vunpack.c.h.b16 %v87
    %v135 = vunpack.c.l.b16 %v88
    %v136 = vunpack.c.h.b16 %v88
    %v137 = vunpack.c.l.b16 %v89
    %v138 = vunpack.c.h.b16 %v89
    %v139 = vunpack.c.l.b16 %v90
    %v140 = vunpack.c.h.b16 %v90
    %v141 = vunpack.c.l.b16 %v91
    %v142 = vunpack.c.h.b16 %v91
    %v143 = vpack.c.b16 %v131, %v127
    %v144 = vpack.c.b16 %v132, %v128
    %v145 = vpack.c.b16 %v133, %v129
    %v146 = vpack.c.b16 %v134, %v130
    %v147 = vpack.c.b16 %v139, %v135
    %v148 = vpack.c.b16 %v140, %v136
    %v149 = vpack.c.b16 %v141, %v137
    %v150 = vpack.c.b16 %v142, %v138
    %vm159 = vcmask 261120
    %v161 = vsel %vm159, %v118, 0
    %163 = vmatprep.subr.bf16.mxu0 %v144
    %164 = vmatpush1.bf16.msra.mxu0 %v143
    %165 = vmatprep.subr.bf16.mxu0 %v148
    %166 = vmatpush1.bf16.msra.mxu0 %v147
    %167 = vmatprep.subr.bf16.mxu0 0
    %168 = vmatpush1.bf16.msra.mxu0 0
    %169 = vmatprep.subr.bf16.mxu0 0
    %170 = vmatpush1.bf16.msra.mxu0 0
    %171 = vmatprep.subr.bf16.mxu0 0
    %172 = vmatpush1.bf16.msra.mxu0 0
    %173 = vmatprep.subr.bf16.mxu0 0
    %174 = vmatpush1.bf16.msra.mxu0 0
    %175 = vmatprep.subr.bf16.mxu0 0
    %176 = vmatpush1.bf16.msra.mxu0 0
    %177 = vmatprep.subr.bf16.mxu0 0
    %178 = vmatpush1.bf16.msra.mxu0 0
    %179 = vmatprep.subr.bf16.mxu0 0
    %180 = vmatpush1.bf16.msra.mxu0 0
    %181 = vmatprep.subr.bf16.mxu0 0
    %182 = vmatpush1.bf16.msra.mxu0 0
    %183 = vmatprep.subr.bf16.mxu0 0
    %184 = vmatpush1.bf16.msra.mxu0 0
    %185 = vmatprep.subr.bf16.mxu0 0
    %186 = vmatpush1.bf16.msra.mxu0 0
    %187 = vmatprep.subr.bf16.mxu0 0
    %188 = vmatpush1.bf16.msra.mxu0 0
    %189 = vmatprep.subr.bf16.mxu0 0
    %190 = vmatpush1.bf16.msra.mxu0 0
    %191 = vmatprep.subr.bf16.mxu0 0
    %192 = vmatpush1.bf16.msra.mxu0 0
    %193 = vmatprep.subr.bf16.mxu0 0
    %194 = vmatpush1.bf16.msra.mxu0 0
    %195 = vmatprep.mubr.bf16.mxu0 0
    %196 = vmatmul.mubr.bf16.gmra.mrb[0].mxu0 %v161
    %v197 = vpop.f32.mrb[0].mxu0
    %v198 = vadd.f32 %v97, %v197
    %v199 = vpop.f32.mrb[0].mxu0
    %v200 = vadd.f32 %v101, %v199
    %v201 = vpop.f32.mrb[0].mxu0
    %v202 = vadd.f32 %v97, %v201
    %v203 = vpop.f32.mrb[0].mxu0
    %v204 = vadd.f32 %v101, %v203
    %205 = vdwg.mxu0
    %206 = vmatprep.subr.bf16.mxu0 %v146
    %207 = vmatpush1.bf16.msra.mxu0 %v145
    %208 = vmatprep.subr.bf16.mxu0 %v150
    %209 = vmatpush1.bf16.msra.mxu0 %v149
    %210 = vmatprep.subr.bf16.mxu0 0
    %211 = vmatpush1.bf16.msra.mxu0 0
    %212 = vmatprep.subr.bf16.mxu0 0
    %213 = vmatpush1.bf16.msra.mxu0 0
    %214 = vmatprep.subr.bf16.mxu0 0
    %215 = vmatpush1.bf16.msra.mxu0 0
    %216 = vmatprep.subr.bf16.mxu0 0
    %217 = vmatpush1.bf16.msra.mxu0 0
    %218 = vmatprep.subr.bf16.mxu0 0
    %219 = vmatpush1.bf16.msra.mxu0 0
    %220 = vmatprep.subr.bf16.mxu0 0
    %221 = vmatpush1.bf16.msra.mxu0 0
    %222 = vmatprep.subr.bf16.mxu0 0
    %223 = vmatpush1.bf16.msra.mxu0 0
    %224 = vmatprep.subr.bf16.mxu0 0
    %225 = vmatpush1.bf16.msra.mxu0 0
    %226 = vmatprep.subr.bf16.mxu0 0
    %227 = vmatpush1.bf16.msra.mxu0 0
    %228 = vmatprep.subr.bf16.mxu0 0
    %229 = vmatpush1.bf16.msra.mxu0 0
    %230 = vmatprep.subr.bf16.mxu0 0
    %231 = vmatpush1.bf16.msra.mxu0 0
    %232 = vmatprep.subr.bf16.mxu0 0
    %233 = vmatpush1.bf16.msra.mxu0 0
    %234 = vmatprep.subr.bf16.mxu0 0
    %235 = vmatpush1.bf16.msra.mxu0 0
    %236 = vmatprep.subr.bf16.mxu0 0
    %237 = vmatpush1.bf16.msra.mxu0 0
    %238 = vmatprep.mubr.bf16.mxu0 0
    %239 = vmatmul.mubr.bf16.gmra.mrb[0].mxu0 %v161
    %v240 = vpop.f32.mrb[0].mxu0
    %v241 = vadd.f32 %v105, %v240
    %v242 = vpop.f32.mrb[0].mxu0
    %v243 = vadd.f32 %v109, %v242
    %v244 = vpop.f32.mrb[0].mxu0
    %v245 = vadd.f32 %v105, %v244
    %v246 = vpop.f32.mrb[0].mxu0
    %v247 = vadd.f32 %v109, %v246
    %248 = vdwg.mxu0
    %v249 = vmax.f32 %v198, 0.0
    %v250 = vmax.f32 %v200, 0.0
    %v251 = vmax.f32 %v241, 0.0
    %v252 = vmax.f32 %v243, 0.0
    %v253 = vmax.f32 %v202, 0.0
    %v254 = vmax.f32 %v204, 0.0
    %v255 = vmax.f32 %v245, 0.0
    %v256 = vmax.f32 %v247, 0.0
    %v257 = vpack.c.bf16 %v253, %v249
    %v258 = vpack.c.bf16 %v254, %v250
    %v259 = vpack.c.bf16 %v255, %v251
    %v260 = vpack.c.bf16 %v256, %v252
    %v261 = vld [vmem:[#allocation6] sm:$0xff]
    %v262 = vld [vmem:[#allocation6 + $0x8] sm:$0xf]
    %v263 = vld [vmem:[#allocation6 + $0xc] sm:$0xff]
    %v264 = vld [vmem:[#allocation6 + $0x14] sm:$0xf]
    %v265 = vld [vmem:[#allocation6 + $0x18] sm:$0xff]
    %v266 = vld [vmem:[#allocation6 + $0x20] sm:$0xf]
    %v267 = vld [vmem:[#allocation6 + $0x24] sm:$0xff]
    %v268 = vld [vmem:[#allocation6 + $0x2c] sm:$0xf]
    %v269 = vld [vmem:[#allocation6 + $0x30] sm:$0xff]
    %v270 = vld [vmem:[#allocation6 + $0x38] sm:$0xf]
    %v271 = vld [vmem:[#allocation6 + $0x3c] sm:$0xff]
    %v272 = vld [vmem:[#allocation6 + $0x44] sm:$0xf]
    %v273 = vld [vmem:[#allocation6 + $0x48] sm:$0xff]
    %v274 = vld [vmem:[#allocation6 + $0x50] sm:$0xf]
    %v275 = vld [vmem:[#allocation6 + $0x54] sm:$0xff]
    %v276 = vld [vmem:[#allocation6 + $0x5c] sm:$0xf]
    %v277 = vld [vmem:[#allocation6 + $0x60] sm:$0xff]
    %v278 = vld [vmem:[#allocation6 + $0x68] sm:$0xf]
    %v279 = vld [vmem:[#allocation6 + $0x6c] sm:$0xff]
    %v280 = vld [vmem:[#allocation6 + $0x74] sm:$0xf]
    %v281 = vld [vmem:[#allocation6 + $0x78] sm:$0xff]
    %v282 = vld [vmem:[#allocation6 + $0x80] sm:$0xf]
    %v283 = vld [vmem:[#allocation6 + $0x84] sm:$0xff]
    %v284 = vld [vmem:[#allocation6 + $0x8c] sm:$0xf]
    %v285 = vld [vmem:[#allocation6 + $0x90] sm:$0xff]
    %v286 = vld [vmem:[#allocation6 + $0x98] sm:$0xf]
    %v287 = vld [vmem:[#allocation6 + $0x9c] sm:$0xff]
    %v288 = vld [vmem:[#allocation6 + $0xa4] sm:$0xf]
    %v289 = vld [vmem:[#allocation6 + $0xa8] sm:$0xff]
    %v290 = vld [vmem:[#allocation6 + $0xb0] sm:$0xf]
    %v291 = vld [vmem:[#allocation6 + $0xb4] sm:$0xff]
    %v292 = vld [vmem:[#allocation6 + $0xbc] sm:$0xf]
    %v293 = vld [vmem:[#allocation6 + $0xc0] sm:$0xff]
    %v294 = vld [vmem:[#allocation6 + $0xc8] sm:$0xf]
    %v295 = vld [vmem:[#allocation6 + $0xcc] sm:$0xff]
    %v296 = vld [vmem:[#allocation6 + $0xd4] sm:$0xf]
    %v297 = vld [vmem:[#allocation6 + $0xd8] sm:$0xff]
    %v298 = vld [vmem:[#allocation6 + $0xe0] sm:$0xf]
    %v299 = vld [vmem:[#allocation6 + $0xe4] sm:$0xff]
    %v300 = vld [vmem:[#allocation6 + $0xec] sm:$0xf]
    %v301 = vld [vmem:[#allocation6 + $0xf0] sm:$0xff]
    %v302 = vld [vmem:[#allocation6 + $0xf8] sm:$0xf]
    %v303 = vld [vmem:[#allocation6 + $0xfc] sm:$0xff]
    %v304 = vld [vmem:[#allocation6 + $0x104] sm:$0xf]
    %v305 = vld [vmem:[#allocation6 + $0x108] sm:$0xff]
    %v306 = vld [vmem:[#allocation6 + $0x110] sm:$0xf]
    %v307 = vld [vmem:[#allocation6 + $0x114] sm:$0xff]
    %v308 = vld [vmem:[#allocation6 + $0x11c] sm:$0xf]
    %v309 = vld [vmem:[#allocation6 + $0x120] sm:$0xff]
    %v310 = vld [vmem:[#allocation6 + $0x128] sm:$0xf]
    %v311 = vld [vmem:[#allocation6 + $0x12c] sm:$0xff]
    %v312 = vld [vmem:[#allocation6 + $0x134] sm:$0xf]
    %v313 = vld [vmem:[#allocation6 + $0x138] sm:$0xff]
    %v314 = vld [vmem:[#allocation6 + $0x140] sm:$0xf]
    %v315 = vld [vmem:[#allocation6 + $0x144] sm:$0xff]
    %v316 = vld [vmem:[#allocation6 + $0x14c] sm:$0xf]
    %v317 = vld [vmem:[#allocation6 + $0x150] sm:$0xff]
    %v318 = vld [vmem:[#allocation6 + $0x158] sm:$0xf]
    %v319 = vld [vmem:[#allocation6 + $0x15c] sm:$0xff]
    %v320 = vld [vmem:[#allocation6 + $0x164] sm:$0xf]
    %v321 = vld [vmem:[#allocation6 + $0x168] sm:$0xff]
    %v322 = vld [vmem:[#allocation6 + $0x170] sm:$0xf]
    %v323 = vld [vmem:[#allocation6 + $0x174] sm:$0xff]
    %v324 = vld [vmem:[#allocation6 + $0x17c] sm:$0xf]
    %v325 = vld [vmem:[#allocation6 + $0x180] sm:$0xff]
    %v326 = vld [vmem:[#allocation6 + $0x188] sm:$0xf]
    %v327 = vld [vmem:[#allocation6 + $0x18c] sm:$0xff]
    %v328 = vld [vmem:[#allocation6 + $0x194] sm:$0xf]
    %v329 = vld [vmem:[#allocation6 + $0x198] sm:$0xff]
    %v330 = vld [vmem:[#allocation6 + $0x1a0] sm:$0xf]
    %v331 = vld [vmem:[#allocation6 + $0x1a4] sm:$0xff]
    %v332 = vld [vmem:[#allocation6 + $0x1ac] sm:$0xf]
    %v333 = vld [vmem:[#allocation6 + $0x1b0] sm:$0xff]
    %v334 = vld [vmem:[#allocation6 + $0x1b8] sm:$0xf]
    %v335 = vld [vmem:[#allocation6 + $0x1bc] sm:$0xff]
    %v336 = vld [vmem:[#allocation6 + $0x1c4] sm:$0xf]
    %v337 = vld [vmem:[#allocation6 + $0x1c8] sm:$0xff]
    %v338 = vld [vmem:[#allocation6 + $0x1d0] sm:$0xf]
    %v339 = vld [vmem:[#allocation6 + $0x1d4] sm:$0xff]
    %v340 = vld [vmem:[#allocation6 + $0x1dc] sm:$0xf]
    %v341 = vld [vmem:[#allocation6 + $0x1e0] sm:$0xff]
    %v342 = vld [vmem:[#allocation6 + $0x1e8] sm:$0xf]
    %v343 = vld [vmem:[#allocation6 + $0x1ec] sm:$0xff]
    %v344 = vld [vmem:[#allocation6 + $0x1f4] sm:$0xf]
    %v345 = vld [vmem:[#allocation6 + $0x1f8] sm:$0xff]
    %v346 = vld [vmem:[#allocation6 + $0x200] sm:$0xf]
    %v347 = vld [vmem:[#allocation6 + $0x204] sm:$0xff]
    %v348 = vld [vmem:[#allocation6 + $0x20c] sm:$0xf]
    %v349 = vld [vmem:[#allocation6 + $0x210] sm:$0xff]
    %v350 = vld [vmem:[#allocation6 + $0x218] sm:$0xf]
    %v351 = vld [vmem:[#allocation6 + $0x21c] sm:$0xff]
    %v352 = vld [vmem:[#allocation6 + $0x224] sm:$0xf]
    %v353 = vld [vmem:[#allocation6 + $0x228] sm:$0xff]
    %v354 = vld [vmem:[#allocation6 + $0x230] sm:$0xf]
    %v355 = vld [vmem:[#allocation6 + $0x234] sm:$0xff]
    %v356 = vld [vmem:[#allocation6 + $0x23c] sm:$0xf]
    %v357 = vld [vmem:[#allocation6 + $0x240] sm:$0xff]
    %v358 = vld [vmem:[#allocation6 + $0x248] sm:$0xf]
    %v359 = vld [vmem:[#allocation6 + $0x24c] sm:$0xff]
    %v360 = vld [vmem:[#allocation6 + $0x254] sm:$0xf]
    %v361 = vld [vmem:[#allocation6 + $0x258] sm:$0xff]
    %v362 = vld [vmem:[#allocation6 + $0x260] sm:$0xf]
    %v363 = vld [vmem:[#allocation6 + $0x264] sm:$0xff]
    %v364 = vld [vmem:[#allocation6 + $0x26c] sm:$0xf]
    %v365 = vld [vmem:[#allocation6 + $0x270] sm:$0xff]
    %v366 = vld [vmem:[#allocation6 + $0x278] sm:$0xf]
    %v367 = vld [vmem:[#allocation6 + $0x27c] sm:$0xff]
    %v368 = vld [vmem:[#allocation6 + $0x284] sm:$0xf]
    %v369 = vld [vmem:[#allocation6 + $0x288] sm:$0xff]
    %v370 = vld [vmem:[#allocation6 + $0x290] sm:$0xf]
    %v371 = vld [vmem:[#allocation6 + $0x294] sm:$0xff]
    %v372 = vld [vmem:[#allocation6 + $0x29c] sm:$0xf]
    %v373 = vld [vmem:[#allocation6 + $0x2a0] sm:$0xff]
    %v374 = vld [vmem:[#allocation6 + $0x2a8] sm:$0xf]
    %v375 = vld [vmem:[#allocation6 + $0x2ac] sm:$0xff]
    %v376 = vld [vmem:[#allocation6 + $0x2b4] sm:$0xf]
    %v377 = vld [vmem:[#allocation6 + $0x2b8] sm:$0xff]
    %v378 = vld [vmem:[#allocation6 + $0x2c0] sm:$0xf]
    %v379 = vld [vmem:[#allocation6 + $0x2c4] sm:$0xff]
    %v380 = vld [vmem:[#allocation6 + $0x2cc] sm:$0xf]
    %v381 = vld [vmem:[#allocation6 + $0x2d0] sm:$0xff]
    %v382 = vld [vmem:[#allocation6 + $0x2d8] sm:$0xf]
    %v383 = vld [vmem:[#allocation6 + $0x2dc] sm:$0xff]
    %v384 = vld [vmem:[#allocation6 + $0x2e4] sm:$0xf]
    %v385 = vld [vmem:[#allocation6 + $0x2e8] sm:$0xff]
    %v386 = vld [vmem:[#allocation6 + $0x2f0] sm:$0xf]
    %v387 = vld [vmem:[#allocation6 + $0x2f4] sm:$0xff]
    %v388 = vld [vmem:[#allocation6 + $0x2fc] sm:$0xf]
    %v389 = vld [vmem:[%s4] sm:$0x7]
    %v391 = vlaneseq
    %v392 = vshrl.u32 %v391, 7
    %v393 = vsub.s32 0, %v392
    %v394 = vrot.slane %v389, %v393
    %v395 = vlaneseq
    %v396 = vshrl.u32 %v395, 7
    %v397 = vsub.s32 1, %v396
    %v398 = vrot.slane %v389, %v397
    %v399 = vlaneseq
    %v400 = vshrl.u32 %v399, 7
    %v401 = vsub.s32 2, %v400
    %v402 = vrot.slane %v389, %v401
    %v534 = vunpack.c.l.b16 %v261
    %v535 = vunpack.c.h.b16 %v261
    %v536 = vunpack.c.l.b16 %v262
    %v537 = vunpack.c.l.b16 %v263
    %v538 = vunpack.c.h.b16 %v263
    %v539 = vunpack.c.l.b16 %v264
    %v540 = vunpack.c.l.b16 %v265
    %v541 = vunpack.c.h.b16 %v265
    %v542 = vunpack.c.l.b16 %v266
    %v543 = vunpack.c.l.b16 %v267
    %v544 = vunpack.c.h.b16 %v267
    %v545 = vunpack.c.l.b16 %v268
    %v546 = vunpack.c.l.b16 %v269
    %v547 = vunpack.c.h.b16 %v269
    %v548 = vunpack.c.l.b16 %v270
    %v549 = vunpack.c.l.b16 %v271
    %v550 = vunpack.c.h.b16 %v271
    %v551 = vunpack.c.l.b16 %v272
    %v552 = vunpack.c.l.b16 %v273
    %v553 = vunpack.c.h.b16 %v273
    %v554 = vunpack.c.l.b16 %v274
    %v555 = vunpack.c.l.b16 %v275
    %v556 = vunpack.c.h.b16 %v275
    %v557 = vunpack.c.l.b16 %v276
    %v558 = vunpack.c.l.b16 %v277
    %v559 = vunpack.c.h.b16 %v277
    %v560 = vunpack.c.l.b16 %v278
    %v561 = vunpack.c.l.b16 %v279
    %v562 = vunpack.c.h.b16 %v279
    %v563 = vunpack.c.l.b16 %v280
    %v564 = vunpack.c.l.b16 %v281
    %v565 = vunpack.c.h.b16 %v281
    %v566 = vunpack.c.l.b16 %v282
    %v567 = vunpack.c.l.b16 %v283
    %v568 = vunpack.c.h.b16 %v283
    %v569 = vunpack.c.l.b16 %v284
    %v570 = vunpack.c.l.b16 %v285
    %v571 = vunpack.c.h.b16 %v285
    %v572 = vunpack.c.l.b16 %v286
    %v573 = vunpack.c.l.b16 %v287
    %v574 = vunpack.c.h.b16 %v287
    %v575 = vunpack.c.l.b16 %v288
    %v576 = vunpack.c.l.b16 %v289
    %v577 = vunpack.c.h.b16 %v289
    %v578 = vunpack.c.l.b16 %v290
    %v579 = vunpack.c.l.b16 %v291
    %v580 = vunpack.c.h.b16 %v291
    %v581 = vunpack.c.l.b16 %v292
    %v582 = vunpack.c.l.b16 %v293
    %v583 = vunpack.c.h.b16 %v293
    %v584 = vunpack.c.l.b16 %v294
    %v585 = vunpack.c.l.b16 %v295
    %v586 = vunpack.c.h.b16 %v295
    %v587 = vunpack.c.l.b16 %v296
    %v588 = vunpack.c.l.b16 %v297
    %v589 = vunpack.c.h.b16 %v297
    %v590 = vunpack.c.l.b16 %v298
    %v591 = vunpack.c.l.b16 %v299
    %v592 = vunpack.c.h.b16 %v299
    %v593 = vunpack.c.l.b16 %v300
    %v594 = vunpack.c.l.b16 %v301
    %v595 = vunpack.c.h.b16 %v301
    %v596 = vunpack.c.l.b16 %v302
    %v597 = vunpack.c.l.b16 %v303
    %v598 = vunpack.c.h.b16 %v303
    %v599 = vunpack.c.l.b16 %v304
    %v600 = vunpack.c.l.b16 %v305
    %v601 = vunpack.c.h.b16 %v305
    %v602 = vunpack.c.l.b16 %v306
    %v603 = vunpack.c.l.b16 %v307
    %v604 = vunpack.c.h.b16 %v307
    %v605 = vunpack.c.l.b16 %v308
    %v606 = vunpack.c.l.b16 %v309
    %v607 = vunpack.c.h.b16 %v309
    %v608 = vunpack.c.l.b16 %v310
    %v609 = vunpack.c.l.b16 %v311
    %v610 = vunpack.c.h.b16 %v311
    %v611 = vunpack.c.l.b16 %v312
    %v612 = vunpack.c.l.b16 %v313
    %v613 = vunpack.c.h.b16 %v313
    %v614 = vunpack.c.l.b16 %v314
    %v615 = vunpack.c.l.b16 %v315
    %v616 = vunpack.c.h.b16 %v315
    %v617 = vunpack.c.l.b16 %v316
    %v618 = vunpack.c.l.b16 %v317
    %v619 = vunpack.c.h.b16 %v317
    %v620 = vunpack.c.l.b16 %v318
    %v621 = vunpack.c.l.b16 %v319
    %v622 = vunpack.c.h.b16 %v319
    %v623 = vunpack.c.l.b16 %v320
    %v624 = vunpack.c.l.b16 %v321
    %v625 = vunpack.c.h.b16 %v321
    %v626 = vunpack.c.l.b16 %v322
    %v627 = vunpack.c.l.b16 %v323
    %v628 = vunpack.c.h.b16 %v323
    %v629 = vunpack.c.l.b16 %v324
    %v630 = vunpack.c.l.b16 %v325
    %v631 = vunpack.c.h.b16 %v325
    %v632 = vunpack.c.l.b16 %v326
    %v633 = vunpack.c.l.b16 %v327
    %v634 = vunpack.c.h.b16 %v327
    %v635 = vunpack.c.l.b16 %v328
    %v636 = vunpack.c.l.b16 %v329
    %v637 = vunpack.c.h.b16 %v329
    %v638 = vunpack.c.l.b16 %v330
    %v639 = vunpack.c.l.b16 %v331
    %v640 = vunpack.c.h.b16 %v331
    %v641 = vunpack.c.l.b16 %v332
    %v642 = vunpack.c.l.b16 %v333
    %v643 = vunpack.c.h.b16 %v333
    %v644 = vunpack.c.l.b16 %v334
    %v645 = vunpack.c.l.b16 %v335
    %v646 = vunpack.c.h.b16 %v335
    %v647 = vunpack.c.l.b16 %v336
    %v648 = vunpack.c.l.b16 %v337
    %v649 = vunpack.c.h.b16 %v337
    %v650 = vunpack.c.l.b16 %v338
    %v651 = vunpack.c.l.b16 %v339
    %v652 = vunpack.c.h.b16 %v339
    %v653 = vunpack.c.l.b16 %v340
    %v654 = vunpack.c.l.b16 %v341
    %v655 = vunpack.c.h.b16 %v341
    %v656 = vunpack.c.l.b16 %v342
    %v657 = vunpack.c.l.b16 %v343
    %v658 = vunpack.c.h.b16 %v343
    %v659 = vunpack.c.l.b16 %v344
    %v660 = vunpack.c.l.b16 %v345
    %v661 = vunpack.c.h.b16 %v345
    %v662 = vunpack.c.l.b16 %v346
    %v663 = vunpack.c.l.b16 %v347
    %v664 = vunpack.c.h.b16 %v347
    %v665 = vunpack.c.l.b16 %v348
    %v666 = vunpack.c.l.b16 %v349
    %v667 = vunpack.c.h.b16 %v349
    %v668 = vunpack.c.l.b16 %v350
    %v669 = vunpack.c.l.b16 %v351
    %v670 = vunpack.c.h.b16 %v351
    %v671 = vunpack.c.l.b16 %v352
    %v672 = vunpack.c.l.b16 %v353
    %v673 = vunpack.c.h.b16 %v353
    %v674 = vunpack.c.l.b16 %v354
    %v675 = vunpack.c.l.b16 %v355
    %v676 = vunpack.c.h.b16 %v355
    %v677 = vunpack.c.l.b16 %v356
    %v678 = vunpack.c.l.b16 %v357
    %v679 = vunpack.c.h.b16 %v357
    %v680 = vunpack.c.l.b16 %v358
    %v681 = vunpack.c.l.b16 %v359
    %v682 = vunpack.c.h.b16 %v359
    %v683 = vunpack.c.l.b16 %v360
    %v684 = vunpack.c.l.b16 %v361
    %v685 = vunpack.c.h.b16 %v361
    %v686 = vunpack.c.l.b16 %v362
    %v687 = vunpack.c.l.b16 %v363
    %v688 = vunpack.c.h.b16 %v363
    %v689 = vunpack.c.l.b16 %v364
    %v690 = vunpack.c.l.b16 %v365
    %v691 = vunpack.c.h.b16 %v365
    %v692 = vunpack.c.l.b16 %v366
    %v693 = vunpack.c.l.b16 %v367
    %v694 = vunpack.c.h.b16 %v367
    %v695 = vunpack.c.l.b16 %v368
    %v696 = vunpack.c.l.b16 %v369
    %v697 = vunpack.c.h.b16 %v369
    %v698 = vunpack.c.l.b16 %v370
    %v699 = vunpack.c.l.b16 %v371
    %v700 = vunpack.c.h.b16 %v371
    %v701 = vunpack.c.l.b16 %v372
    %v702 = vunpack.c.l.b16 %v373
    %v703 = vunpack.c.h.b16 %v373
    %v704 = vunpack.c.l.b16 %v374
    %v705 = vunpack.c.l.b16 %v375
    %v706 = vunpack.c.h.b16 %v375
    %v707 = vunpack.c.l.b16 %v376
    %v708 = vunpack.c.l.b16 %v377
    %v709 = vunpack.c.h.b16 %v377
    %v710 = vunpack.c.l.b16 %v378
    %v711 = vunpack.c.l.b16 %v379
    %v712 = vunpack.c.h.b16 %v379
    %v713 = vunpack.c.l.b16 %v380
    %v714 = vunpack.c.l.b16 %v381
    %v715 = vunpack.c.h.b16 %v381
    %v716 = vunpack.c.l.b16 %v382
    %v717 = vunpack.c.l.b16 %v383
    %v718 = vunpack.c.h.b16 %v383
    %v719 = vunpack.c.l.b16 %v384
    %v720 = vunpack.c.l.b16 %v385
    %v721 = vunpack.c.h.b16 %v385
    %v722 = vunpack.c.l.b16 %v386
    %v723 = vunpack.c.l.b16 %v387
    %v724 = vunpack.c.h.b16 %v387
    %v725 = vunpack.c.l.b16 %v388
    %v726 = vpack.c.b16 %v537, %v534
    %v727 = vpack.c.b16 %v538, %v535
    %v728 = vpack.c.b16 %v539, %v536
    %v729 = vpack.c.b16 %v543, %v540
    %v730 = vpack.c.b16 %v544, %v541
    %v731 = vpack.c.b16 %v545, %v542
    %v732 = vpack.c.b16 %v549, %v546
    %v733 = vpack.c.b16 %v550, %v547
    %v734 = vpack.c.b16 %v551, %v548
    %v735 = vpack.c.b16 %v555, %v552
    %v736 = vpack.c.b16 %v556, %v553
    %v737 = vpack.c.b16 %v557, %v554
    %v738 = vpack.c.b16 %v561, %v558
    %v739 = vpack.c.b16 %v562, %v559
    %v740 = vpack.c.b16 %v563, %v560
    %v741 = vpack.c.b16 %v567, %v564
    %v742 = vpack.c.b16 %v568, %v565
    %v743 = vpack.c.b16 %v569, %v566
    %v744 = vpack.c.b16 %v573, %v570
    %v745 = vpack.c.b16 %v574, %v571
    %v746 = vpack.c.b16 %v575, %v572
    %v747 = vpack.c.b16 %v579, %v576
    %v748 = vpack.c.b16 %v580, %v577
    %v749 = vpack.c.b16 %v581, %v578
    %v750 = vpack.c.b16 %v585, %v582
    %v751 = vpack.c.b16 %v586, %v583
    %v752 = vpack.c.b16 %v587, %v584
    %v753 = vpack.c.b16 %v591, %v588
    %v754 = vpack.c.b16 %v592, %v589
    %v755 = vpack.c.b16 %v593, %v590
    %v756 = vpack.c.b16 %v597, %v594
    %v757 = vpack.c.b16 %v598, %v595
    %v758 = vpack.c.b16 %v599, %v596
    %v759 = vpack.c.b16 %v603, %v600
    %v760 = vpack.c.b16 %v604, %v601
    %v761 = vpack.c.b16 %v605, %v602
    %v762 = vpack.c.b16 %v609, %v606
    %v763 = vpack.c.b16 %v610, %v607
    %v764 = vpack.c.b16 %v611, %v608
    %v765 = vpack.c.b16 %v615, %v612
    %v766 = vpack.c.b16 %v616, %v613
    %v767 = vpack.c.b16 %v617, %v614
    %v768 = vpack.c.b16 %v621, %v618
    %v769 = vpack.c.b16 %v622, %v619
    %v770 = vpack.c.b16 %v623, %v620
    %v771 = vpack.c.b16 %v627, %v624
    %v772 = vpack.c.b16 %v628, %v625
    %v773 = vpack.c.b16 %v629, %v626
    %v774 = vpack.c.b16 %v633, %v630
    %v775 = vpack.c.b16 %v634, %v631
    %v776 = vpack.c.b16 %v635, %v632
    %v777 = vpack.c.b16 %v639, %v636
    %v778 = vpack.c.b16 %v640, %v637
    %v779 = vpack.c.b16 %v641, %v638
    %v780 = vpack.c.b16 %v645, %v642
    %v781 = vpack.c.b16 %v646, %v643
    %v782 = vpack.c.b16 %v647, %v644
    %v783 = vpack.c.b16 %v651, %v648
    %v784 = vpack.c.b16 %v652, %v649
    %v785 = vpack.c.b16 %v653, %v650
    %v786 = vpack.c.b16 %v657, %v654
    %v787 = vpack.c.b16 %v658, %v655
    %v788 = vpack.c.b16 %v659, %v656
    %v789 = vpack.c.b16 %v663, %v660
    %v790 = vpack.c.b16 %v664, %v661
    %v791 = vpack.c.b16 %v665, %v662
    %v792 = vpack.c.b16 %v669, %v666
    %v793 = vpack.c.b16 %v670, %v667
    %v794 = vpack.c.b16 %v671, %v668
    %v795 = vpack.c.b16 %v675, %v672
    %v796 = vpack.c.b16 %v676, %v673
    %v797 = vpack.c.b16 %v677, %v674
    %v798 = vpack.c.b16 %v681, %v678
    %v799 = vpack.c.b16 %v682, %v679
    %v800 = vpack.c.b16 %v683, %v680
    %v801 = vpack.c.b16 %v687, %v684
    %v802 = vpack.c.b16 %v688, %v685
    %v803 = vpack.c.b16 %v689, %v686
    %v804 = vpack.c.b16 %v693, %v690
    %v805 = vpack.c.b16 %v694, %v691
    %v806 = vpack.c.b16 %v695, %v692
    %v807 = vpack.c.b16 %v699, %v696
    %v808 = vpack.c.b16 %v700, %v697
    %v809 = vpack.c.b16 %v701, %v698
    %v810 = vpack.c.b16 %v705, %v702
    %v811 = vpack.c.b16 %v706, %v703
    %v812 = vpack.c.b16 %v707, %v704
    %v813 = vpack.c.b16 %v711, %v708
    %v814 = vpack.c.b16 %v712, %v709
    %v815 = vpack.c.b16 %v713, %v710
    %v816 = vpack.c.b16 %v717, %v714
    %v817 = vpack.c.b16 %v718, %v715
    %v818 = vpack.c.b16 %v719, %v716
    %v819 = vpack.c.b16 %v723, %v720
    %v820 = vpack.c.b16 %v724, %v721
    %v821 = vpack.c.b16 %v725, %v722
    %918 = vmatprep.subr.bf16.mxu0 %v727
    %919 = vmatpush1.bf16.msra.mxu0 %v726
    %920 = vmatprep.subr.bf16.mxu0 %v730
    %921 = vmatpush1.bf16.msra.mxu0 %v729
    %922 = vmatprep.subr.bf16.mxu0 %v733
    %923 = vmatpush1.bf16.msra.mxu0 %v732
    %924 = vmatprep.subr.bf16.mxu0 %v736
    %925 = vmatpush1.bf16.msra.mxu0 %v735
    %926 = vmatprep.subr.bf16.mxu0 %v739
    %927 = vmatpush1.bf16.msra.mxu0 %v738
    %928 = vmatprep.subr.bf16.mxu0 %v742
    %929 = vmatpush1.bf16.msra.mxu0 %v741
    %930 = vmatprep.subr.bf16.mxu0 %v745
    %931 = vmatpush1.bf16.msra.mxu0 %v744
    %932 = vmatprep.subr.bf16.mxu0 %v748
    %933 = vmatpush1.bf16.msra.mxu0 %v747
    %934 = vmatprep.subr.bf16.mxu0 %v751
    %935 = vmatpush1.bf16.msra.mxu0 %v750
    %936 = vmatprep.subr.bf16.mxu0 %v754
    %937 = vmatpush1.bf16.msra.mxu0 %v753
    %938 = vmatprep.subr.bf16.mxu0 %v757
    %939 = vmatpush1.bf16.msra.mxu0 %v756
    %940 = vmatprep.subr.bf16.mxu0 %v760
    %941 = vmatpush1.bf16.msra.mxu0 %v759
    %942 = vmatprep.subr.bf16.mxu0 %v763
    %943 = vmatpush1.bf16.msra.mxu0 %v762
    %944 = vmatprep.subr.bf16.mxu0 %v766
    %945 = vmatpush1.bf16.msra.mxu0 %v765
    %946 = vmatprep.subr.bf16.mxu0 %v769
    %947 = vmatpush1.bf16.msra.mxu0 %v768
    %948 = vmatprep.subr.bf16.mxu0 %v772
    %949 = vmatpush1.bf16.msra.mxu0 %v771
    %950 = vmatprep.mubr.bf16.mxu0 %v258
    %951 = vmatmul.mubr.bf16.gmra.mrb[0].mxu0 %v257
    %v952 = vpop.f32.mrb[0].mxu0
    %v953 = vadd.f32 %v394, %v952
    %v954 = vpop.f32.mrb[0].mxu0
    %v955 = vadd.f32 %v398, %v954
    %v956 = vpop.f32.mrb[0].mxu0
    %v957 = vadd.f32 %v394, %v956
    %v958 = vpop.f32.mrb[0].mxu0
    %v959 = vadd.f32 %v398, %v958
    %960 = vdwg.mxu0
    %961 = vmatprep.subr.bf16.mxu0 %v775
    %962 = vmatpush1.bf16.msra.mxu0 %v774
    %963 = vmatprep.subr.bf16.mxu0 %v778
    %964 = vmatpush1.bf16.msra.mxu0 %v777
    %965 = vmatprep.subr.bf16.mxu0 %v781
    %966 = vmatpush1.bf16.msra.mxu0 %v780
    %967 = vmatprep.subr.bf16.mxu0 %v784
    %968 = vmatpush1.bf16.msra.mxu0 %v783
    %969 = vmatprep.subr.bf16.mxu0 %v787
    %970 = vmatpush1.bf16.msra.mxu0 %v786
    %971 = vmatprep.subr.bf16.mxu0 %v790
    %972 = vmatpush1.bf16.msra.mxu0 %v789
    %973 = vmatprep.subr.bf16.mxu0 %v793
    %974 = vmatpush1.bf16.msra.mxu0 %v792
    %975 = vmatprep.subr.bf16.mxu0 %v796
    %976 = vmatpush1.bf16.msra.mxu0 %v795
    %977 = vmatprep.subr.bf16.mxu0 %v799
    %978 = vmatpush1.bf16.msra.mxu0 %v798
    %979 = vmatprep.subr.bf16.mxu0 %v802
    %980 = vmatpush1.bf16.msra.mxu0 %v801
    %981 = vmatprep.subr.bf16.mxu0 %v805
    %982 = vmatpush1.bf16.msra.mxu0 %v804
    %983 = vmatprep.subr.bf16.mxu0 %v808
    %984 = vmatpush1.bf16.msra.mxu0 %v807
    %985 = vmatprep.subr.bf16.mxu0 %v811
    %986 = vmatpush1.bf16.msra.mxu0 %v810
    %987 = vmatprep.subr.bf16.mxu0 %v814
    %988 = vmatpush1.bf16.msra.mxu0 %v813
    %989 = vmatprep.subr.bf16.mxu0 %v817
    %990 = vmatpush1.bf16.msra.mxu0 %v816
    %991 = vmatprep.subr.bf16.mxu0 %v820
    %992 = vmatpush1.bf16.msra.mxu0 %v819
    %993 = vmatprep.mubr.bf16.mxu0 %v260
    %994 = vmatmul.mubr.bf16.gmra.mrb[0].mxu0 %v259
    %v995 = vpop.f32.mrb[0].mxu0
    %v996 = vadd.f32 %v953, %v995
    %v997 = vpop.f32.mrb[0].mxu0
    %v998 = vadd.f32 %v955, %v997
    %v999 = vpop.f32.mrb[0].mxu0
    %v1000 = vadd.f32 %v957, %v999
    %v1001 = vpop.f32.mrb[0].mxu0
    %v1002 = vadd.f32 %v959, %v1001
    %1003 = vdwg.mxu0
    %1004 = vmatprep.subr.bf16.mxu0 0
    %1005 = vmatpush1.bf16.msra.mxu0 %v728
    %1006 = vmatprep.subr.bf16.mxu0 0
    %1007 = vmatpush1.bf16.msra.mxu0 %v731
    %1008 = vmatprep.subr.bf16.mxu0 0
    %1009 = vmatpush1.bf16.msra.mxu0 %v734
    %1010 = vmatprep.subr.bf16.mxu0 0
    %1011 = vmatpush1.bf16.msra.mxu0 %v737
    %1012 = vmatprep.subr.bf16.mxu0 0
    %1013 = vmatpush1.bf16.msra.mxu0 %v740
    %1014 = vmatprep.subr.bf16.mxu0 0
    %1015 = vmatpush1.bf16.msra.mxu0 %v743
    %1016 = vmatprep.subr.bf16.mxu0 0
    %1017 = vmatpush1.bf16.msra.mxu0 %v746
    %1018 = vmatprep.subr.bf16.mxu0 0
    %1019 = vmatpush1.bf16.msra.mxu0 %v749
    %1020 = vmatprep.subr.bf16.mxu0 0
    %1021 = vmatpush1.bf16.msra.mxu0 %v752
    %1022 = vmatprep.subr.bf16.mxu0 0
    %1023 = vmatpush1.bf16.msra.mxu0 %v755
    %1024 = vmatprep.subr.bf16.mxu0 0
    %1025 = vmatpush1.bf16.msra.mxu0 %v758
    %1026 = vmatprep.subr.bf16.mxu0 0
    %1027 = vmatpush1.bf16.msra.mxu0 %v761
    %1028 = vmatprep.subr.bf16.mxu0 0
    %1029 = vmatpush1.bf16.msra.mxu0 %v764
    %1030 = vmatprep.subr.bf16.mxu0 0
    %1031 = vmatpush1.bf16.msra.mxu0 %v767
    %1032 = vmatprep.subr.bf16.mxu0 0
    %1033 = vmatpush1.bf16.msra.mxu0 %v770
    %1034 = vmatprep.subr.bf16.mxu0 0
    %1035 = vmatpush1.bf16.msra.mxu0 %v773
    %1036 = vmatprep.mubr.bf16.mxu0 %v258
    %1037 = vmatmul.mubr.bf16.gmra.mrb[0].mxu0 %v257
    %v1038 = vpop.f32.mrb[0].mxu0
    %v1039 = vadd.f32 %v402, %v1038
    %v1040 = vpop.f32.mrb[0].mxu0
    %v1041 = vpop.f32.mrb[0].mxu0
    %v1042 = vadd.f32 %v402, %v1041
    %v1043 = vpop.f32.mrb[0].mxu0
    %1044 = vdwg.mxu0
    %1045 = vmatprep.subr.bf16.mxu0 0
    %1046 = vmatpush1.bf16.msra.mxu0 %v776
    %1047 = vmatprep.subr.bf16.mxu0 0
    %1048 = vmatpush1.bf16.msra.mxu0 %v779
    %1049 = vmatprep.subr.bf16.mxu0 0
    %1050 = vmatpush1.bf16.msra.mxu0 %v782
    %1051 = vmatprep.subr.bf16.mxu0 0
    %1052 = vmatpush1.bf16.msra.mxu0 %v785
    %1053 = vmatprep.subr.bf16.mxu0 0
    %1054 = vmatpush1.bf16.msra.mxu0 %v788
    %1055 = vmatprep.subr.bf16.mxu0 0
    %1056 = vmatpush1.bf16.msra.mxu0 %v791
    %1057 = vmatprep.subr.bf16.mxu0 0
    %1058 = vmatpush1.bf16.msra.mxu0 %v794
    %1059 = vmatprep.subr.bf16.mxu0 0
    %1060 = vmatpush1.bf16.msra.mxu0 %v797
    %1061 = vmatprep.subr.bf16.mxu0 0
    %1062 = vmatpush1.bf16.msra.mxu0 %v800
    %1063 = vmatprep.subr.bf16.mxu0 0
    %1064 = vmatpush1.bf16.msra.mxu0 %v803
    %1065 = vmatprep.subr.bf16.mxu0 0
    %1066 = vmatpush1.bf16.msra.mxu0 %v806
    %1067 = vmatprep.subr.bf16.mxu0 0
    %1068 = vmatpush1.bf16.msra.mxu0 %v809
    %1069 = vmatprep.subr.bf16.mxu0 0
    %1070 = vmatpush1.bf16.msra.mxu0 %v812
    %1071 = vmatprep.subr.bf16.mxu0 0
    %1072 = vmatpush1.bf16.msra.mxu0 %v815
    %1073 = vmatprep.subr.bf16.mxu0 0
    %1074 = vmatpush1.bf16.msra.mxu0 %v818
    %1075 = vmatprep.subr.bf16.mxu0 0
    %1076 = vmatpush1.bf16.msra.mxu0 %v821
    %1077 = vmatprep.mubr.bf16.mxu0 %v260
    %1078 = vmatmul.mubr.bf16.gmra.mrb[0].mxu0 %v259
    %v1079 = vpop.f32.mrb[0].mxu0
    %v1080 = vadd.f32 %v1039, %v1079
    %v1081 = vpop.f32.mrb[0].mxu0
    %v1082 = vpop.f32.mrb[0].mxu0
    %v1083 = vadd.f32 %v1042, %v1082
    %v1084 = vpop.f32.mrb[0].mxu0
    %1085 = vdwg.mxu0
    %v1086 = vmax.f32 %v996, 0.0
    %v1087 = vmax.f32 %v998, 0.0
    %v1088 = vmax.f32 %v1080, 0.0
    %v1089 = vmax.f32 %v1000, 0.0
    %v1090 = vmax.f32 %v1002, 0.0
    %v1091 = vmax.f32 %v1083, 0.0
    %v1092 = vpack.c.bf16 %v1089, %v1086
    %v1093 = vpack.c.bf16 %v1090, %v1087
    %v1094 = vpack.c.bf16 %v1091, %v1088
    %v1095 = vld [vmem:[#allocation7] sm:$0xf]
    %v1096 = vld [vmem:[#allocation7 + $0x4] sm:$0xf]
    %v1097 = vld [vmem:[#allocation7 + $0x8] sm:$0xf]
    %v1098 = vld [vmem:[#allocation7 + $0xc] sm:$0xf]
    %v1099 = vld [vmem:[#allocation7 + $0x10] sm:$0xf]
    %v1100 = vld [vmem:[#allocation7 + $0x14] sm:$0xf]
    %v1101 = vld [vmem:[#allocation7 + $0x18] sm:$0xf]
    %v1102 = vld [vmem:[#allocation7 + $0x1c] sm:$0xf]
    %v1103 = vld [vmem:[#allocation7 + $0x20] sm:$0xf]
    %v1104 = vld [vmem:[#allocation7 + $0x24] sm:$0xf]
    %v1105 = vld [vmem:[#allocation7 + $0x28] sm:$0xf]
    %v1106 = vld [vmem:[#allocation7 + $0x2c] sm:$0xf]
    %v1107 = vld [vmem:[#allocation7 + $0x30] sm:$0xf]
    %v1108 = vld [vmem:[#allocation7 + $0x34] sm:$0xf]
    %v1109 = vld [vmem:[#allocation7 + $0x38] sm:$0xf]
    %v1110 = vld [vmem:[#allocation7 + $0x3c] sm:$0xf]
    %v1111 = vld [vmem:[#allocation7 + $0x40] sm:$0xf]
    %v1112 = vld [vmem:[#allocation7 + $0x44] sm:$0xf]
    %v1113 = vld [vmem:[#allocation7 + $0x48] sm:$0xf]
    %v1114 = vld [vmem:[#allocation7 + $0x4c] sm:$0xf]
    %v1115 = vld [vmem:[#allocation7 + $0x50] sm:$0xf]
    %v1116 = vld [vmem:[#allocation7 + $0x54] sm:$0xf]
    %v1117 = vld [vmem:[#allocation7 + $0x58] sm:$0xf]
    %v1118 = vld [vmem:[#allocation7 + $0x5c] sm:$0xf]
    %v1119 = vld [vmem:[#allocation7 + $0x60] sm:$0xf]
    %v1120 = vld [vmem:[#allocation7 + $0x64] sm:$0xf]
    %v1121 = vld [vmem:[#allocation7 + $0x68] sm:$0xf]
    %v1122 = vld [vmem:[#allocation7 + $0x6c] sm:$0xf]
    %v1123 = vld [vmem:[#allocation7 + $0x70] sm:$0xf]
    %v1124 = vld [vmem:[#allocation7 + $0x74] sm:$0xf]
    %v1125 = vld [vmem:[#allocation7 + $0x78] sm:$0xf]
    %v1126 = vld [vmem:[#allocation7 + $0x7c] sm:$0xf]
    %v1127 = vld [vmem:[#allocation7 + $0x80] sm:$0xf]
    %v1128 = vld [vmem:[#allocation7 + $0x84] sm:$0xf]
    %v1129 = vld [vmem:[#allocation7 + $0x88] sm:$0xf]
    %v1130 = vld [vmem:[#allocation7 + $0x8c] sm:$0xf]
    %v1131 = vld [vmem:[#allocation7 + $0x90] sm:$0xf]
    %v1132 = vld [vmem:[#allocation7 + $0x94] sm:$0xf]
    %v1133 = vld [vmem:[#allocation7 + $0x98] sm:$0xf]
    %v1134 = vld [vmem:[#allocation7 + $0x9c] sm:$0xf]
    %v1135 = vld [vmem:[#allocation7 + $0xa0] sm:$0xf]
    %v1136 = vld [vmem:[#allocation7 + $0xa4] sm:$0xf]
    %v1137 = vld [vmem:[#allocation7 + $0xa8] sm:$0xf]
    %v1138 = vld [vmem:[#allocation7 + $0xac] sm:$0xf]
    %v1139 = vld [vmem:[#allocation7 + $0xb0] sm:$0xf]
    %v1140 = vld [vmem:[#allocation7 + $0xb4] sm:$0xf]
    %v1141 = vld [vmem:[#allocation7 + $0xb8] sm:$0xf]
    %v1142 = vld [vmem:[#allocation7 + $0xbc] sm:$0xf]
    %v1143 = vld [vmem:[%s6] sm:$0x1]
    %v1145 = vlaneseq
    %v1146 = vshrl.u32 %v1145, 7
    %v1147 = vsub.s32 0, %v1146
    %v1148 = vrot.slane %v1143, %v1147
    %v1198 = vunpack.c.l.b16 %v1095
    %v1199 = vunpack.c.l.b16 %v1096
    %v1200 = vunpack.c.l.b16 %v1097
    %v1201 = vunpack.c.l.b16 %v1098
    %v1202 = vunpack.c.l.b16 %v1099
    %v1203 = vunpack.c.l.b16 %v1100
    %v1204 = vunpack.c.l.b16 %v1101
    %v1205 = vunpack.c.l.b16 %v1102
    %v1206 = vunpack.c.l.b16 %v1103
    %v1207 = vunpack.c.l.b16 %v1104
    %v1208 = vunpack.c.l.b16 %v1105
    %v1209 = vunpack.c.l.b16 %v1106
    %v1210 = vunpack.c.l.b16 %v1107
    %v1211 = vunpack.c.l.b16 %v1108
    %v1212 = vunpack.c.l.b16 %v1109
    %v1213 = vunpack.c.l.b16 %v1110
    %v1214 = vunpack.c.l.b16 %v1111
    %v1215 = vunpack.c.l.b16 %v1112
    %v1216 = vunpack.c.l.b16 %v1113
    %v1217 = vunpack.c.l.b16 %v1114
    %v1218 = vunpack.c.l.b16 %v1115
    %v1219 = vunpack.c.l.b16 %v1116
    %v1220 = vunpack.c.l.b16 %v1117
    %v1221 = vunpack.c.l.b16 %v1118
    %v1222 = vunpack.c.l.b16 %v1119
    %v1223 = vunpack.c.l.b16 %v1120
    %v1224 = vunpack.c.l.b16 %v1121
    %v1225 = vunpack.c.l.b16 %v1122
    %v1226 = vunpack.c.l.b16 %v1123
    %v1227 = vunpack.c.l.b16 %v1124
    %v1228 = vunpack.c.l.b16 %v1125
    %v1229 = vunpack.c.l.b16 %v1126
    %v1230 = vunpack.c.l.b16 %v1127
    %v1231 = vunpack.c.l.b16 %v1128
    %v1232 = vunpack.c.l.b16 %v1129
    %v1233 = vunpack.c.l.b16 %v1130
    %v1234 = vunpack.c.l.b16 %v1131
    %v1235 = vunpack.c.l.b16 %v1132
    %v1236 = vunpack.c.l.b16 %v1133
    %v1237 = vunpack.c.l.b16 %v1134
    %v1238 = vunpack.c.l.b16 %v1135
    %v1239 = vunpack.c.l.b16 %v1136
    %v1240 = vunpack.c.l.b16 %v1137
    %v1241 = vunpack.c.l.b16 %v1138
    %v1242 = vunpack.c.l.b16 %v1139
    %v1243 = vunpack.c.l.b16 %v1140
    %v1244 = vunpack.c.l.b16 %v1141
    %v1245 = vunpack.c.l.b16 %v1142
    %v1246 = vpack.c.b16 %v1199, %v1198
    %v1247 = vpack.c.b16 %v1201, %v1200
    %v1248 = vpack.c.b16 %v1203, %v1202
    %v1249 = vpack.c.b16 %v1205, %v1204
    %v1250 = vpack.c.b16 %v1207, %v1206
    %v1251 = vpack.c.b16 %v1209, %v1208
    %v1252 = vpack.c.b16 %v1211, %v1210
    %v1253 = vpack.c.b16 %v1213, %v1212
    %v1254 = vpack.c.b16 %v1215, %v1214
    %v1255 = vpack.c.b16 %v1217, %v1216
    %v1256 = vpack.c.b16 %v1219, %v1218
    %v1257 = vpack.c.b16 %v1221, %v1220
    %v1258 = vpack.c.b16 %v1223, %v1222
    %v1259 = vpack.c.b16 %v1225, %v1224
    %v1260 = vpack.c.b16 %v1227, %v1226
    %v1261 = vpack.c.b16 %v1229, %v1228
    %v1262 = vpack.c.b16 %v1231, %v1230
    %v1263 = vpack.c.b16 %v1233, %v1232
    %v1264 = vpack.c.b16 %v1235, %v1234
    %v1265 = vpack.c.b16 %v1237, %v1236
    %v1266 = vpack.c.b16 %v1239, %v1238
    %v1267 = vpack.c.b16 %v1241, %v1240
    %v1268 = vpack.c.b16 %v1243, %v1242
    %v1269 = vpack.c.b16 %v1245, %v1244
    %1294 = vmatprep.subr.bf16.mxu0 0
    %1295 = vmatpush1.bf16.msra.mxu0 %v1246
    %1296 = vmatprep.subr.bf16.mxu0 0
    %1297 = vmatpush1.bf16.msra.mxu0 %v1247
    %1298 = vmatprep.subr.bf16.mxu0 0
    %1299 = vmatpush1.bf16.msra.mxu0 %v1248
    %1300 = vmatprep.subr.bf16.mxu0 0
    %1301 = vmatpush1.bf16.msra.mxu0 %v1249
    %1302 = vmatprep.subr.bf16.mxu0 0
    %1303 = vmatpush1.bf16.msra.mxu0 %v1250
    %1304 = vmatprep.subr.bf16.mxu0 0
    %1305 = vmatpush1.bf16.msra.mxu0 %v1251
    %1306 = vmatprep.subr.bf16.mxu0 0
    %1307 = vmatpush1.bf16.msra.mxu0 %v1252
    %1308 = vmatprep.subr.bf16.mxu0 0
    %1309 = vmatpush1.bf16.msra.mxu0 %v1253
    %1310 = vmatprep.subr.bf16.mxu0 0
    %1311 = vmatpush1.bf16.msra.mxu0 %v1254
    %1312 = vmatprep.subr.bf16.mxu0 0
    %1313 = vmatpush1.bf16.msra.mxu0 %v1255
    %1314 = vmatprep.subr.bf16.mxu0 0
    %1315 = vmatpush1.bf16.msra.mxu0 %v1256
    %1316 = vmatprep.subr.bf16.mxu0 0
    %1317 = vmatpush1.bf16.msra.mxu0 %v1257
    %1318 = vmatprep.subr.bf16.mxu0 0
    %1319 = vmatpush1.bf16.msra.mxu0 %v1258
    %1320 = vmatprep.subr.bf16.mxu0 0
    %1321 = vmatpush1.bf16.msra.mxu0 %v1259
    %1322 = vmatprep.subr.bf16.mxu0 0
    %1323 = vmatpush1.bf16.msra.mxu0 %v1260
    %1324 = vmatprep.subr.bf16.mxu0 0
    %1325 = vmatpush1.bf16.msra.mxu0 %v1261
    %1326 = vmatprep.mubr.bf16.mxu0 %v1093
    %1327 = vmatmul.mubr.bf16.gmra.mrb[0].mxu0 %v1092
    %v1328 = vpop.f32.mrb[0].mxu0
    %v1329 = vadd.f32 %v1148, %v1328
    %v1330 = vpop.f32.mrb[0].mxu0
    %v1331 = vpop.f32.mrb[0].mxu0
    %v1332 = vadd.f32 %v1148, %v1331
    %v1333 = vpop.f32.mrb[0].mxu0
    %1334 = vdwg.mxu0
    %1335 = vmatprep.subr.bf16.mxu0 0
    %1336 = vmatpush1.bf16.msra.mxu0 %v1262
    %1337 = vmatprep.subr.bf16.mxu0 0
    %1338 = vmatpush1.bf16.msra.mxu0 %v1263
    %1339 = vmatprep.subr.bf16.mxu0 0
    %1340 = vmatpush1.bf16.msra.mxu0 %v1264
    %1341 = vmatprep.subr.bf16.mxu0 0
    %1342 = vmatpush1.bf16.msra.mxu0 %v1265
    %1343 = vmatprep.subr.bf16.mxu0 0
    %1344 = vmatpush1.bf16.msra.mxu0 %v1266
    %1345 = vmatprep.subr.bf16.mxu0 0
    %1346 = vmatpush1.bf16.msra.mxu0 %v1267
    %1347 = vmatprep.subr.bf16.mxu0 0
    %1348 = vmatpush1.bf16.msra.mxu0 %v1268
    %1349 = vmatprep.subr.bf16.mxu0 0
    %1350 = vmatpush1.bf16.msra.mxu0 %v1269
    %1351 = vmatprep.subr.bf16.mxu0 0
    %1352 = vmatpush1.bf16.msra.mxu0 0
    %1353 = vmatprep.subr.bf16.mxu0 0
    %1354 = vmatpush1.bf16.msra.mxu0 0
    %1355 = vmatprep.subr.bf16.mxu0 0
    %1356 = vmatpush1.bf16.msra.mxu0 0
    %1357 = vmatprep.subr.bf16.mxu0 0
    %1358 = vmatpush1.bf16.msra.mxu0 0
    %1359 = vmatprep.subr.bf16.mxu0 0
    %1360 = vmatpush1.bf16.msra.mxu0 0
    %1361 = vmatprep.subr.bf16.mxu0 0
    %1362 = vmatpush1.bf16.msra.mxu0 0
    %1363 = vmatprep.subr.bf16.mxu0 0
    %1364 = vmatpush1.bf16.msra.mxu0 0
    %1365 = vmatprep.subr.bf16.mxu0 0
    %1366 = vmatpush1.bf16.msra.mxu0 0
    %1367 = vmatprep.mubr.bf16.mxu0 0
    %1368 = vmatmul.mubr.bf16.gmra.mrb[0].mxu0 %v1094
    %v1369 = vpop.f32.mrb[0].mxu0
    %v1370 = vadd.f32 %v1329, %v1369
    %v1371 = vpop.f32.mrb[0].mxu0
    %v1372 = vpop.f32.mrb[0].mxu0
    %v1373 = vadd.f32 %v1332, %v1372
    %v1374 = vpop.f32.mrb[0].mxu0
    %1375 = vdwg.mxu0
    %vm1376 = vcmask 64512
    %1377 = vst.msk [vmem:[%s7] sm:$0xff] %vm1376, %v1370
    %1378 = vst.msk [vmem:[%s7 + $0x8] sm:$0xff] %vm1376, %v1373
    // Predicated region
    $region46: #{tpu_custom_call.1} parent=1 // pred_check
      _
    $region47: #{tpu_custom_call.1} parent=1 // pred_check_branch
      %1380 = sbr.rel (0) target = $region49
    $region48: #{tpu_custom_call.1} parent=1 // pred_region
      _
    $region49: #{tpu_custom_call.1} parent=1 // pred_fallthru
      _
    // Predicated region
    $region50: #{tpu_custom_call.1} parent=1 // pred_check
      _
    $region51: #{tpu_custom_call.1} parent=1 // pred_check_branch
      %1382 = sbr.rel (0) target = $region53
    $region52: #{tpu_custom_call.1} parent=1 // pred_region
      _
    $region53: #{tpu_custom_call.1} parent=1 // pred_fallthru
      _
    %1383 = vsyncpa [#allocation3], 1
    %1384 = vsyncpa [#allocation5], 1
    %1385 = vsyncpa [#allocation8], 1

</llo_original>
